<compile_context>
chip_gen: v5e
topology: v5e:2x2
jax: 0.10.0
libtpu: 0.0.40
codegen_flags: <defaults>
</compile_context>

<pallas_src>
import functools

import jax
import jax.numpy as jnp
from jax.experimental import pallas as pl
from jax.experimental.pallas import tpu as pltpu

# ---- small test instantiation, consistent with typical use of the module ----
BATCH = 2
HEADS = 2
SEQ = 8
DIM_HEAD = 128          # feature dim of the tensor being rotated (lane-dense)
ROT_DIM = 64            # RotaryEmbedding(dim=ROT_DIM): only first 64 features rotate
THETA = 10000.0


def rope_kernel(cos_ref, sin_ref, x_ref, o_ref):
    """out = x * cos + rotate_half(x) * sin on the interleaved pair layout.

    rotate_half on interleaved pairs: (x_even, x_odd) -> (-x_odd, x_even), i.e.
    even feature j takes -x[j+1], odd feature j takes +x[j-1]. The neighbour
    access is a +/-1 rotation along the feature (lane) axis plus a parity
    select; the element that wraps around the axis edge is never selected.
    cos/sin carry 1/0 on the pass-through tail, so there is no branching.
    """
    x = x_ref[...].astype(jnp.float32)              # (TN, D), native dtype -> f32
    c = cos_ref[...]                                # (TN, D) f32
    s = sin_ref[...]                                # (TN, D) f32
    d = x.shape[-1]
    x_next = pltpu.roll(x, d - 1, 1)                # x[:, j+1]   (roll by -1 mod d)
    x_prev = pltpu.roll(x, 1, 1)                    # x[:, j-1]
    lane = jax.lax.broadcasted_iota(jnp.int32, x.shape, 1)
    rot = jnp.where((lane & 1) == 0, -x_next, x_prev)   # rotate_half(x)
    o_ref[...] = (x * c + rot * s).astype(o_ref.dtype)


def _seq_tile(n, max_tile=512):
    """Largest multiple of 8 dividing n (capped at max_tile); else whole seq."""
    best = n
    for cand in range(8, min(n, max_tile) + 1, 8):
        if n % cand == 0:
            best = cand
    return best


def rotary_rotate_queries_or_keys(t, *, rot_dim=ROT_DIM, theta=THETA,
                                  offset=0, interpolate_factor=1.0,
                                  max_seq_tile=512):
    """RotaryEmbedding.rotate_queries_or_keys(t) for t of shape (B, H, N, D)."""
    b, h, n, d = t.shape
    assert d % 2 == 0 and rot_dim % 2 == 0 and rot_dim <= d

    # ---- RotaryEmbedding.forward(): cached cos/sin tables, shape (N, D), f32 ----
    # TODO(synk): xpos scaling (use_xpos=True), learned_freq, freqs_for='pixel'/
    # 'constant' / custom_freqs, and the module's host-side cache bookkeeping
    # have no in-kernel equivalent; these tables are the cached forward() for
    # the default 'lang' configuration.
    inv_freq = 1.0 / theta ** (jnp.arange(0, rot_dim, 2, dtype=jnp.float32) / rot_dim)
    pos = (jnp.arange(n, dtype=jnp.float32) + offset) / interpolate_factor
    freqs = jnp.repeat(pos[:, None] * inv_freq[None, :], 2, axis=-1)     # (N, rot_dim)
    tail = d - rot_dim                     # pass-through features: cos=1, sin=0
    cos_t = jnp.concatenate([jnp.cos(freqs), jnp.ones((n, tail), jnp.float32)], -1)
    sin_t = jnp.concatenate([jnp.sin(freqs), jnp.zeros((n, tail), jnp.float32)], -1)

    bh = b * h
    t_flat = t.reshape(bh, n, d)           # free row-major reshape (no HBM pass)
    tn = _seq_tile(n, max_seq_tile)

    x_spec = pl.BlockSpec((None, tn, d), lambda j, i: (i, j, 0))
    tbl_spec = pl.BlockSpec((tn, d), lambda j, i: (j, 0))   # constant along bh axis

    elems = bh * n * d
    cost = pl.CostEstimate(
        flops=4 * elems,
        transcendentals=0,
        bytes_accessed=2 * elems * t.dtype.itemsize + 2 * n * d * 4)

    out_flat = pl.pallas_call(
        rope_kernel,
        out_shape=jax.ShapeDtypeStruct((bh, n, d), t.dtype),
        grid=(n // tn, bh),                # bh innermost: cos/sin tile stays resident
        in_specs=[tbl_spec, tbl_spec, x_spec],
        out_specs=x_spec,
        compiler_params=pltpu.CompilerParams(
            dimension_semantics=("parallel", "parallel")),
        cost_estimate=cost,
    )(cos_t, sin_t, t_flat)

    return out_flat.reshape(b, h, n, d)


# -------------------- pure-JAX reference (port of the PyTorch module) --------------------
def reference_rotate_queries_or_keys(t, rot_dim, theta=10000.0, offset=0,
                                     interpolate_factor=1.0):
    b, h, n, d = t.shape
    inv_freq = 1.0 / theta ** (jnp.arange(0, rot_dim, 2, dtype=jnp.float32) / rot_dim)
    seq = (jnp.arange(n, dtype=jnp.float32) + offset) / interpolate_factor
    freqs = seq[:, None] * inv_freq[None, :]            # (n, rot_dim/2)
    freqs = jnp.repeat(freqs, 2, axis=-1)               # (n, rot_dim), pairs repeated
    t_mid, t_right = t[..., :rot_dim], t[..., rot_dim:]
    pair = t_mid.reshape(b, h, n, rot_dim // 2, 2)
    x1, x2 = pair[..., 0], pair[..., 1]
    rot = jnp.stack((-x2, x1), axis=-1).reshape(b, h, n, rot_dim)   # rotate_half
    t_trans = t_mid * jnp.cos(freqs) + rot * jnp.sin(freqs)
    return jnp.concatenate((t_trans, t_right), axis=-1)


if __name__ == "__main__":
    key = jax.random.PRNGKey(0)
    t = jax.random.normal(key, (BATCH, HEADS, SEQ, DIM_HEAD), dtype=jnp.float32)

    fn = jax.jit(functools.partial(
        rotary_rotate_queries_or_keys,
        rot_dim=ROT_DIM, theta=THETA, offset=0, interpolate_factor=1.0))

    out = jax.block_until_ready(fn(t))

    ref = reference_rotate_queries_or_keys(t, ROT_DIM, THETA)
    assert out.shape == t.shape
    max_err = float(jnp.max(jnp.abs(out - ref)))
    assert jnp.allclose(out, ref, atol=1e-4, rtol=1e-4), f"max abs err {max_err}"

    print("KERNEL_OK")
</pallas_src>

<mosaic_0001>
module attributes {stable_mosaic.version = 11 : i64} {
  func.func @rope_kernel(%arg0: i32, %arg1: i32, %arg2: memref<8x128xf32, #tpu.memory_space<vmem>>, %arg3: memref<8x128xf32, #tpu.memory_space<vmem>>, %arg4: memref<1x8x128xf32, #tpu.memory_space<vmem>>, %arg5: memref<1x8x128xf32, #tpu.memory_space<vmem>>) attributes {dimension_semantics = [#tpu.dimension_semantics<parallel>, #tpu.dimension_semantics<parallel>], iteration_bounds = array<i64: 1, 4>, scalar_prefetch = 0 : i64, scratch_operands = 0 : i64, tpu.core_type = #tpu.core_type<tc>, window_params = [{transform_indices = @transform_0, window_bounds = array<i64: 8, 128>}, {transform_indices = @transform_1, window_bounds = array<i64: 8, 128>}, {transform_indices = @transform_2, window_bounds = array<i64: 1, 8, 128>}, {transform_indices = @transform_3, window_bounds = array<i64: 1, 8, 128>}]} {
    %c0 = arith.constant 0 : index
    %c0_0 = arith.constant 0 : index
    %c0_1 = arith.constant 0 : index
    %0 = vector.load %arg4[%c0, %c0_0, %c0_1] : memref<1x8x128xf32, #tpu.memory_space<vmem>>, vector<1x8x128xf32>
    %1 = vector.shape_cast %0 : vector<1x8x128xf32> to vector<8x128xf32>
    %c0_2 = arith.constant 0 : index
    %c0_3 = arith.constant 0 : index
    %2 = vector.load %arg2[%c0_2, %c0_3] : memref<8x128xf32, #tpu.memory_space<vmem>>, vector<8x128xf32>
    %c0_4 = arith.constant 0 : index
    %c0_5 = arith.constant 0 : index
    %3 = vector.load %arg3[%c0_4, %c0_5] : memref<8x128xf32, #tpu.memory_space<vmem>>, vector<8x128xf32>
    %c127_i32 = arith.constant 127 : i32
    %4 = tpu.dynamic_rotate %1 by %c127_i32 dim 1 : vector<8x128xf32>, i32 -> vector<8x128xf32>
    %c1_i32 = arith.constant 1 : i32
    %5 = tpu.dynamic_rotate %1 by %c1_i32 dim 1 : vector<8x128xf32>, i32 -> vector<8x128xf32>
    %6 = tpu.iota {dimensions = array<i32: 1>} : vector<8x128xi32>
    %c1_i32_6 = arith.constant 1 : i32
    %7 = vector.broadcast %c1_i32_6 : i32 to vector<8x128xi32>
    %8 = arith.andi %6, %7 : vector<8x128xi32>
    %c0_i32 = arith.constant 0 : i32
    %9 = vector.broadcast %c0_i32 : i32 to vector<8x128xi32>
    %10 = arith.cmpi eq, %8, %9 : vector<8x128xi32>
    %cst = arith.constant 0.000000e+00 : f32
    %11 = vector.broadcast %cst : f32 to vector<8x128xf32>
    %12 = arith.subf %11, %4 : vector<8x128xf32>
    %13 = arith.select %10, %12, %5 : vector<8x128xi1>, vector<8x128xf32>
    %14 = arith.mulf %1, %2 : vector<8x128xf32>
    %15 = arith.mulf %13, %3 : vector<8x128xf32>
    %16 = arith.addf %14, %15 : vector<8x128xf32>
    %c0_7 = arith.constant 0 : index
    %c0_8 = arith.constant 0 : index
    %c0_9 = arith.constant 0 : index
    %17 = vector.load %arg5[%c0_7, %c0_8, %c0_9] : memref<1x8x128xf32, #tpu.memory_space<vmem>>, vector<1x8x128xf32>
    %18 = vector.shape_cast %17 : vector<1x8x128xf32> to vector<8x128xf32>
    %19 = vector.shape_cast %16 : vector<8x128xf32> to vector<1x8x128xf32>
    tpu.vector_store %arg5[%c0_7, %c0_8, %c0_9], %19 {strides = array<i32>} : memref<1x8x128xf32, #tpu.memory_space<vmem>>, vector<1x8x128xf32>,
    return
  }
  func.func @transform_0(%arg0: i32, %arg1: i32) -> (i32, i32) {
    %c0_i32 = arith.constant 0 : i32
    %c0_i32_0 = arith.constant 0 : i32
    return %arg0, %c0_i32 : i32, i32
  }
  func.func @transform_1(%arg0: i32, %arg1: i32) -> (i32, i32) {
    %c0_i32 = arith.constant 0 : i32
    %c0_i32_0 = arith.constant 0 : i32
    return %arg0, %c0_i32 : i32, i32
  }
  func.func @transform_2(%arg0: i32, %arg1: i32) -> (i32, i32, i32) {
    %c0_i32 = arith.constant 0 : i32
    %c0_i32_0 = arith.constant 0 : i32
    return %arg1, %arg0, %c0_i32 : i32, i32, i32
  }
  func.func @transform_3(%arg0: i32, %arg1: i32) -> (i32, i32, i32) {
    %c0_i32 = arith.constant 0 : i32
    %c0_i32_0 = arith.constant 0 : i32
    return %arg1, %arg0, %c0_i32 : i32, i32, i32
  }
}

</mosaic_0001>

<llo_original>
// kernel: rotary_rotate_queries_or_keys.1
$region0: #{rotary_rotate_queries_or_keys.1}
  #allocation0 [shape = 'u32[]', space=smem, size = 0x4, offset = 0x4, fixed_abs, tag = 'smem constant byte address 0x4 - core index']
  #allocation1 [shape = 'u32[72,128]{1,0:T(1,128)}', space=vmem, size = 0x9000, scoped, tag = 'internal scratch']
  %s0 = inlined_call_operand.vmem [shape: f32[8,128], index: 0, kind: input, shape index: {}]
  %s1 = inlined_call_operand.vmem [shape: f32[8,128], index: 1, kind: input, shape index: {}]
  %s2 = inlined_call_operand.vmem [shape: f32[4,8,128], index: 2, kind: input, shape index: {}]
  %s3 = inlined_call_operand.hbm [shape: f32[4,8,128], index: 3, kind: output, shape index: {}]
  %s4 = sld [smem:[#allocation0]]
  $region45: #{rotary_rotate_queries_or_keys.1} parent=0
    _
  %s6 = ssub.s32 1, %s4
  %s7 = scalar_select 0, %s6, %s4
  $region1: #{rotary_rotate_queries_or_keys.1} parent=0
    #allocation2 [shape = 'u8[8192]{0}', space=vmem, size = 0x2000, scoped, tag = 'output window, operand 0']
    #allocation3 [shape = 's32[2]{0}', space=sflag, size = 0x8, scoped, tag = 'scoped memory for rotary_rotate_queries_or_keys.1']
    %8 = vsyncpa [#allocation3], 0
    %s9 = scalar_lea.sflag [#allocation3], 1
    %10 = vsyncpa %s9, 0
    loop: start=0, step=1, limit=6
    $region2: #{rotary_rotate_queries_or_keys.1} parent=1 // loop_pre_header
      _
    $region3: #{rotary_rotate_queries_or_keys.1} parent=1 // loop_header
      %s12 = sphi 0, %s16
      %p13 = scmp.ge.s32.totalorder %s12, 6
      %s19 = sphi 0, %s31
      %s20 = sphi 0, %s27
      %s21 = sphi 0, %s19
      %s22 = sphi 0, %s20
      %s23 = sphi 0, %s21
      %s24 = sphi 0, %s22
      %s34 = sphi 0, %s36
      %s37 = sphi 0, %s34
      %s38 = sphi 0, %s37
      %s54 = sphi 0, %s38
      %s60 = sphi 0, %s62
      %s63 = sphi 0, %s60
      %s64 = sphi 0, %s63
      %s80 = sphi 0, %s64
      %s88 = sphi 0, %s90
      %s91 = sphi 0, %s88
      %s92 = sphi 0, %s91
      %s108 = sphi 0, %s92
      %s116 = sphi 0, %s118
      %s119 = sphi 0, %s116
      %s120 = sphi 0, %s119
      %s136 = sphi 0, %s120
    $region4: #{rotary_rotate_queries_or_keys.1} parent=1 // loop_header_branch
      %15 = sbr.rel (%p13) target = $region8
    $region5: #{rotary_rotate_queries_or_keys.1} parent=1 // loop_body
      %s17 = ssub.s32 %s12, 1
      %s18 = ssub.s32 %s12, 2
      %s25 = sadd.s32 1, %s20
      %p26 = scmp.ge.s32.totalorder %s25, 4
      %s27 = scalar_select %p26, 0, %s25
      %s28 = sadd.s32 1, %s19
      %s29 = scalar_select %p26, %s28, %s19
      %p30 = scmp.ge.s32.totalorder %s29, 1
      %s31 = scalar_select %p30, 0, %s29
      %s32 = ssub.s32 %s19, %s31
      %p33 = scmp.eq.s32.totalorder %s32, 0
      %s35 = sadd.s32 %s34, 1
      %s36 = scalar_select %p33, %s34, %s35
      %p39 = pneg %p33
      %p40 = scmp.eq.s32.totalorder %s12, 3
      %p41 = por %p39, %p40
      %p42 = scmp.ne.s32.totalorder %s34, %s37
      %p43 = scmp.eq.s32.totalorder %s12, 0
      %p44 = por %p42, %p43
      %p45 = scmp.ne.s32.totalorder %s34, %s37
      %p46 = scmp.eq.s32.totalorder %s17, 3
      %p47 = por %p45, %p46
      %p48 = scmp.ne.s32.totalorder %s37, %s38
      %p49 = scmp.eq.s32.totalorder %s17, 0
      %p50 = por %p48, %p49
      %p51 = scmp.ne.s32.totalorder %s37, %s38
      %p52 = scmp.eq.s32.totalorder %s18, 3
      %p53 = por %p51, %p52
      %p55 = scmp.ne.s32.totalorder %s38, %s54
      %p56 = scmp.eq.s32.totalorder %s18, 0
      %p57 = por %p55, %p56
      %s58 = ssub.s32 %s19, %s31
      %p59 = scmp.eq.s32.totalorder %s58, 0
      %s61 = sadd.s32 %s60, 1
      %s62 = scalar_select %p59, %s60, %s61
      %p65 = pneg %p59
      %p66 = scmp.eq.s32.totalorder %s12, 3
      %p67 = por %p65, %p66
      %p68 = scmp.ne.s32.totalorder %s60, %s63
      %p69 = scmp.eq.s32.totalorder %s12, 0
      %p70 = por %p68, %p69
      %p71 = scmp.ne.s32.totalorder %s60, %s63
      %p72 = scmp.eq.s32.totalorder %s17, 3
      %p73 = por %p71, %p72
      %p74 = scmp.ne.s32.totalorder %s63, %s64
      %p75 = scmp.eq.s32.totalorder %s17, 0
      %p76 = por %p74, %p75
      %p77 = scmp.ne.s32.totalorder %s63, %s64
      %p78 = scmp.eq.s32.totalorder %s18, 3
      %p79 = por %p77, %p78
      %p81 = scmp.ne.s32.totalorder %s64, %s80
      %p82 = scmp.eq.s32.totalorder %s18, 0
      %p83 = por %p81, %p82
      %s84 = ssub.s32 %s20, %s27
      %s85 = ssub.s32 %s19, %s31
      %s86 = sor.u32 %s84, %s85
      %p87 = scmp.eq.s32.totalorder %s86, 0
      %s89 = sadd.s32 %s88, 1
      %s90 = scalar_select %p87, %s88, %s89
      %p93 = pneg %p87
      %p94 = scmp.eq.s32.totalorder %s12, 3
      %p95 = por %p93, %p94
      %p96 = scmp.ne.s32.totalorder %s88, %s91
      %p97 = scmp.eq.s32.totalorder %s12, 0
      %p98 = por %p96, %p97
      %p99 = scmp.ne.s32.totalorder %s88, %s91
      %p100 = scmp.eq.s32.totalorder %s17, 3
      %p101 = por %p99, %p100
      %p102 = scmp.ne.s32.totalorder %s91, %s92
      %p103 = scmp.eq.s32.totalorder %s17, 0
      %p104 = por %p102, %p103
      %p105 = scmp.ne.s32.totalorder %s91, %s92
      %p106 = scmp.eq.s32.totalorder %s18, 3
      %p107 = por %p105, %p106
      %p109 = scmp.ne.s32.totalorder %s92, %s108
      %p110 = scmp.eq.s32.totalorder %s18, 0
      %p111 = por %p109, %p110
      %s112 = ssub.s32 %s20, %s27
      %s113 = ssub.s32 %s19, %s31
      %s114 = sor.u32 %s112, %s113
      %p115 = scmp.eq.s32.totalorder %s114, 0
      %s117 = sadd.s32 %s116, 1
      %s118 = scalar_select %p115, %s116, %s117
      %p121 = pneg %p115
      %p122 = scmp.eq.s32.totalorder %s12, 3
      %p123 = por %p121, %p122
      %p124 = scmp.ne.s32.totalorder %s116, %s119
      %p125 = scmp.eq.s32.totalorder %s12, 0
      %p126 = por %p124, %p125
      %p127 = scmp.ne.s32.totalorder %s116, %s119
      %p128 = scmp.eq.s32.totalorder %s17, 3
      %p129 = por %p127, %p128
      %p130 = scmp.ne.s32.totalorder %s119, %s120
      %p131 = scmp.eq.s32.totalorder %s17, 0
      %p132 = por %p130, %p131
      %p133 = scmp.ne.s32.totalorder %s119, %s120
      %p134 = scmp.eq.s32.totalorder %s18, 3
      %p135 = por %p133, %p134
      %p137 = scmp.ne.s32.totalorder %s120, %s136
      %p138 = scmp.eq.s32.totalorder %s18, 0
      %p139 = por %p137, %p138
      %p140 = scmp.le.s32.totalorder 1, %s12
      %p141 = scmp.lt.s32.totalorder %s12, 5
      %p142 = pnand %p140, %p141
      %p143 = pneg %p142
      // Predicated region
      $region9: #{rotary_rotate_queries_or_keys.1} parent=5 // pred_check
        _
      $region10: #{rotary_rotate_queries_or_keys.1} parent=5 // pred_check_branch
        %145 = sbr.rel (%p142) target = $region12
      $region11: #{rotary_rotate_queries_or_keys.1} parent=5 // pred_region
        %s146 = ssub.s32 %s12, 1
        // Predicated region
        $region13: #{rotary_rotate_queries_or_keys.1} parent=11 // pred_check
          %p147 = pneg %p50
        $region14: #{rotary_rotate_queries_or_keys.1} parent=11 // pred_check_branch
          %149 = sbr.rel (%p147) target = $region16
        $region15: #{rotary_rotate_queries_or_keys.1} parent=11 // pred_region
          %p150 = scmp.lt.s32.totalorder %s21, 0
          %s151 = scalar_select %p150, %s21, 0
          %s152 = smul.addr %s151, 8
          %s153 = scalar_lea.vmem %s0, %s152
        $region16: #{rotary_rotate_queries_or_keys.1} parent=11 // pred_fallthru
          _
        // Predicated region
        $region17: #{rotary_rotate_queries_or_keys.1} parent=11 // pred_check
          %p154 = pneg %p76
        $region18: #{rotary_rotate_queries_or_keys.1} parent=11 // pred_check_branch
          %156 = sbr.rel (%p154) target = $region20
        $region19: #{rotary_rotate_queries_or_keys.1} parent=11 // pred_region
          %p157 = scmp.lt.s32.totalorder %s21, 0
          %s158 = scalar_select %p157, %s21, 0
          %s159 = smul.addr %s158, 8
          %s160 = scalar_lea.vmem %s1, %s159
        $region20: #{rotary_rotate_queries_or_keys.1} parent=11 // pred_fallthru
          _
      $region12: #{rotary_rotate_queries_or_keys.1} parent=5 // pred_fallthru
        _
      %p161 = scmp.lt.s32.totalorder %s12, 4
      // Predicated region
      $region21: #{rotary_rotate_queries_or_keys.1} parent=5 // pred_check
        %p162 = pneg %p161
      $region22: #{rotary_rotate_queries_or_keys.1} parent=5 // pred_check_branch
        %164 = sbr.rel (%p162) target = $region24
      $region23: #{rotary_rotate_queries_or_keys.1} parent=5 // pred_region
        // Predicated region
        $region25: #{rotary_rotate_queries_or_keys.1} parent=23 // pred_check
          %p165 = pneg %p98
        $region26: #{rotary_rotate_queries_or_keys.1} parent=23 // pred_check_branch
          %167 = sbr.rel (%p165) target = $region28
        $region27: #{rotary_rotate_queries_or_keys.1} parent=23 // pred_region
          %p168 = scmp.lt.s32.totalorder %s20, 3
          %s169 = scalar_select %p168, %s20, 3
          %p170 = scmp.lt.s32.totalorder %s19, 0
          %s171 = scalar_select %p170, %s19, 0
          %s172 = sadd.s32 %s171, %s169
          %s173 = smul.addr %s172, 8
          %s174 = scalar_lea.vmem %s2, %s173
        $region28: #{rotary_rotate_queries_or_keys.1} parent=23 // pred_fallthru
          _
      $region24: #{rotary_rotate_queries_or_keys.1} parent=5 // pred_fallthru
        _
      %p175 = scmp.le.s32.totalorder 1, %s12
      %p176 = scmp.lt.s32.totalorder %s12, 5
      %p177 = pnand %p175, %p176
      %p178 = pneg %p177
      // Predicated region
      $region29: #{rotary_rotate_queries_or_keys.1} parent=5 // pred_check
        _
      $region30: #{rotary_rotate_queries_or_keys.1} parent=5 // pred_check_branch
        %180 = sbr.rel (%p177) target = $region32
      $region31: #{rotary_rotate_queries_or_keys.1} parent=5 // pred_region
        %s181 = ssub.s32 %s12, 1
        %p182 = scmp.lt.s32.totalorder %s21, 0
        %s183 = scalar_select %p182, %s21, 0
        %s184 = smul.addr %s183, 8
        %s185 = scalar_lea.vmem %s0, %s184
        %p186 = pneg %p50
        %p187 = pneg %p47
        %p188 = scmp.lt.s32.totalorder %s21, 0
        %s189 = scalar_select %p188, %s21, 0
        %s190 = smul.addr %s189, 8
        %s191 = scalar_lea.vmem %s1, %s190
        %p192 = pneg %p76
        %p193 = pneg %p73
        %p194 = scmp.lt.s32.totalorder %s22, 3
        %s195 = scalar_select %p194, %s22, 3
        %p196 = scmp.lt.s32.totalorder %s21, 0
        %s197 = scalar_select %p196, %s21, 0
        %s198 = sadd.s32 %s197, %s195
        %s199 = smul.addr %s198, 8
        %s200 = scalar_lea.vmem %s2, %s199
        %p201 = pneg %p104
        %p202 = pneg %p101
        %p203 = pneg %p132
        %p204 = pneg %p129
        %s205 = sand.u32 %s119, 1
        %s206 = scalar_lea.sflag [#allocation3], %s205
        %s207 = sand.u32 %s119, 1
        %s208 = smul.addr %s207, 8
        %s209 = scalar_lea.vmem [#allocation2], %s208
        %p210 = scmp.lt.s32.totalorder %s21, 0
        %s211 = scalar_select %p210, %s21, 0
        %s212 = smul.addr %s211, 8
        %s213 = scalar_lea.vmem %s0, %s212
        %p214 = scmp.lt.s32.totalorder %s21, 0
        %s215 = scalar_select %p214, %s21, 0
        %s216 = smul.addr %s215, 8
        %s217 = scalar_lea.vmem %s1, %s216
        %p218 = scmp.lt.s32.totalorder %s22, 3
        %s219 = scalar_select %p218, %s22, 3
        %p220 = scmp.lt.s32.totalorder %s21, 0
        %s221 = scalar_select %p220, %s21, 0
        %s222 = sadd.s32 %s221, %s219
        %s223 = smul.addr %s222, 8
        %s224 = scalar_lea.vmem %s2, %s223
        %v225 = vld [vmem:[%s224] sm:$0xff]
        %v226 = vld [vmem:[%s213] sm:$0xff]
        %v227 = vld [vmem:[%s217] sm:$0xff]
        %228 = vrot.lane.b32.xlu0 %v225, 127
        %v229 = vpop.permute.xlu0 %228
        %230 = vrot.lane.b32.xlu0 %v225, 1
        %v231 = vpop.permute.xlu0 %230
        %v232 = vlaneseq
        %v233 = vand.u32 %v232, 127
        %v234 = vand.u32 %v233, 1
        %vm235 = vcmp.eq.s32.totalorder %v234, 0
        %v236 = vsub.f32 0.0, %v229
        %v237 = vsel %vm235, %v236, %v231
        %v238 = vmul.f32 %v225, %v226
        %v239 = vmul.f32 %v237, %v227
        %v240 = vadd.f32 %v238, %v239
        %241 = vst [vmem:[%s209] sm:$0xff] %v240
        %s242 = sand.u32 %s119, 1
        %s243 = scalar_lea.sflag [#allocation3], %s242
        %s244 = sand.u32 %s119, 1
        %s245 = smul.addr %s244, 8
        %s246 = scalar_lea.vmem [#allocation2], %s245
        // Predicated region
        $region33: #{rotary_rotate_queries_or_keys.1} parent=31 // pred_check
          %p247 = pneg %p129
        $region34: #{rotary_rotate_queries_or_keys.1} parent=31 // pred_check_branch
          %249 = sbr.rel (%p247) target = $region36
        $region35: #{rotary_rotate_queries_or_keys.1} parent=31 // pred_region
          %251 = vsyncadd %s243, 0
          %s252 = sadd.s32 %s21, %s22
          %s253 = smul.addr %s252, 8
          %s254 = scalar_lea.hbm %s3, %s253
          %s256 = sshll.u32 %s246, 4
          %s257 = int_to_ptr.vmem [resolvable:$true] %s256
          %s258 = sshll.u32 %s254, 4
          %s259 = int_to_ptr.hbm [resolvable:$true] %s258
          %261 = dma.vmem_to_hbm [thread:$0]  %s257, 128, %s259, %s243
        $region36: #{rotary_rotate_queries_or_keys.1} parent=31 // pred_fallthru
          _
      $region32: #{rotary_rotate_queries_or_keys.1} parent=5 // pred_fallthru
        _
      %p262 = scmp.le.s32.totalorder 2, %s12
      // Predicated region
      $region37: #{rotary_rotate_queries_or_keys.1} parent=5 // pred_check
        %p263 = pneg %p262
      $region38: #{rotary_rotate_queries_or_keys.1} parent=5 // pred_check_branch
        %265 = sbr.rel (%p263) target = $region40
      $region39: #{rotary_rotate_queries_or_keys.1} parent=5 // pred_region
        %s266 = ssub.s32 %s12, 2
        // Predicated region
        $region41: #{rotary_rotate_queries_or_keys.1} parent=39 // pred_check
          %p267 = pneg %p135
        $region42: #{rotary_rotate_queries_or_keys.1} parent=39 // pred_check_branch
          %269 = sbr.rel (%p267) target = $region44
        $region43: #{rotary_rotate_queries_or_keys.1} parent=39 // pred_region
          %s270 = sand.u32 %s120, 1
          %s271 = scalar_lea.sflag [#allocation3], %s270
          %s272 = sand.u32 %s120, 1
          %s273 = smul.addr %s272, 8
          %s274 = scalar_lea.vmem [#allocation2], %s273
          %276 = dma.done %s271, 128
        $region44: #{rotary_rotate_queries_or_keys.1} parent=39 // pred_fallthru
          _
      $region40: #{rotary_rotate_queries_or_keys.1} parent=5 // pred_fallthru
        _
    $region6: #{rotary_rotate_queries_or_keys.1} parent=1 // loop_footer
      %s16 = sadd.s32 1, %s12
    $region7: #{rotary_rotate_queries_or_keys.1} parent=1 // loop_footer_branch
      %11 = sbr.rel target = $region3
    $region8: #{rotary_rotate_queries_or_keys.1} parent=1 // loop_exit
      _
    %277 = vsyncpa [#allocation3], 1
    %s278 = scalar_lea.sflag [#allocation3], 1
    %279 = vsyncpa %s278, 1

</llo_original>
